<compile_context>
chip_gen: v6e
topology: v6e:2x2x1
jax: 0.10.0
libtpu: 0.0.40
codegen_flags: <defaults>
</compile_context>

<pallas_src>
import math

import jax
import jax.numpy as jnp
from jax.experimental import pallas as pl
from jax.experimental.pallas import tpu as pltpu


def _round_up(x, m):
    return ((x + m - 1) // m) * m


def _pad2d(a, shape, dtype):
    a = a.astype(dtype)
    if a.shape == shape:
        return a
    return jnp.zeros(shape, dtype).at[: a.shape[0], : a.shape[1]].set(a)


def _vmem_budget_bytes():
    """Per-generation VMEM budget (leave headroom for compiler scratch)."""
    cap = 64 * 1024 * 1024  # conservative default (v7x per-TC VMEM)
    try:
        cap = int(pltpu.get_tpu_info().vmem_capacity_bytes)
    except Exception:
        pass
    return max(32 * 1024 * 1024, int(cap * 0.8))


# --------------------------- kernel 1: support = X @ W ---------------------

def _xw_kernel(x_ref, w_ref, sup_ref):
    sup_ref[...] = jnp.dot(
        x_ref[...], w_ref[...], preferred_element_type=jnp.float32
    ).astype(sup_ref.dtype)


# ----------------------- kernel 2: out = adj @ support (+ b) ---------------

def _make_spmm_kernel(tk, resident_support, has_bias):
    """out[i,:] accumulated directly in the (VMEM-resident) f32 output block."""

    def kernel(*refs):
        if has_bias:
            adj_ref, sup_ref, b_ref, out_ref = refs
        else:
            adj_ref, sup_ref, out_ref = refs
            b_ref = None

        k = pl.program_id(1)
        nk = pl.num_programs(1)

        if resident_support:
            # Whole support lives in VMEM; slice the K-slab for this step.
            off = pl.multiple_of(k * tk, 128)
            sup = sup_ref[pl.ds(off, tk), :]
        else:
            sup = sup_ref[...]

        part = jnp.dot(adj_ref[...], sup, preferred_element_type=jnp.float32)

        @pl.when(k == 0)
        def _():
            out_ref[...] = part

        @pl.when(k != 0)
        def _():
            out_ref[...] = out_ref[...] + part

        if has_bias:  # static (trace-time) choice

            @pl.when(k == nk - 1)
            def _():
                out_ref[...] = out_ref[...] + b_ref[...]

    return kernel


# --------------------------------- wrapper ---------------------------------

def graph_convolution(x, adj, weight, bias=None, *, row_tile=512, k_tile=1024):
    """Pallas GCN layer: adj @ (x @ weight) + bias."""
    n, n_in = x.shape
    n_in2, n_out = weight.shape
    assert n_in == n_in2
    assert adj.shape == (n, n)

    # Tile hygiene: multiples of 128, clamped to the problem size.
    row_tile = max(128, _round_up(int(row_tile), 128))
    k_tile = max(128, _round_up(int(k_tile), 128))
    tm = min(row_tile, _round_up(n, 128))
    tk = min(k_tile, _round_up(n, 128))
    # Megacore: make sure >=2 row tiles exist so both v7x TCs get work.
    while tm > 128 and -(-n // tm) < 2:
        tm = max(128, _round_up(tm // 2, 128))

    # Lane-dense output / support last dim.
    # TODO(synk): pad to 256 on v6e/v7x when n_out > 128 (full MXU width) once
    # the kernel stops being HBM-bound (e.g. after the block-sparse path).
    n_out_p = _round_up(n_out, 128)

    # Independent padding of the row and contraction axes (no lcm blow-up).
    n_rows_p = _round_up(n, tm)
    n_k_p = _round_up(n, tk)

    vmem_limit = _vmem_budget_bytes()

    # VMEM footprint accounting (double-buffered inputs/outputs, worst case).
    bytes_adj_tiles = 2 * tm * tk * 2                      # bf16
    bytes_out_tiles = 2 * tm * n_out_p * 4                 # f32
    bytes_bias = (2 * n_out_p * 4) if bias is not None else 0
    bytes_sup_resident = 2 * n_k_p * n_out_p * 2           # bf16, resident
    fixed = bytes_adj_tiles + bytes_out_tiles + bytes_bias
    resident_support = fixed + bytes_sup_resident <= vmem_limit

    # Padded inputs (zero padding is exact: padded x rows -> zero support rows,
    # padded adj rows/cols contribute nothing to the valid output region).
    x_p = _pad2d(x, (n_k_p, n_in), jnp.float32)
    w_p = _pad2d(weight, (n_in, n_out_p), jnp.float32)
    adj_p = _pad2d(adj, (n_rows_p, n_k_p), jnp.bfloat16)

    # ---- support = X @ W (f32 accumulate, bf16 out for the adj spmm) ----
    xw_tm = min(tk, n_k_p)  # divides n_k_p by construction; large rows/step
    support = pl.pallas_call(
        _xw_kernel,
        out_shape=jax.ShapeDtypeStruct((n_k_p, n_out_p), jnp.bfloat16),
        grid_spec=pltpu.PrefetchScalarGridSpec(
            num_scalar_prefetch=0,
            grid=(n_k_p // xw_tm,),
            in_specs=[
                pl.BlockSpec((xw_tm, n_in), lambda i: (i, 0)),       # x rows
                pl.BlockSpec((n_in, n_out_p), lambda i: (0, 0)),     # full W
            ],
            out_specs=pl.BlockSpec((xw_tm, n_out_p), lambda i: (i, 0)),
        ),
        compiler_params=pltpu.CompilerParams(
            dimension_semantics=("parallel",),
            vmem_limit_bytes=vmem_limit,
        ),
    )(x_p, w_p)

    # ---- out = adj @ support + bias, tiled over (row tiles, K tiles) ----
    grid = (n_rows_p // tm, n_k_p // tk)

    if resident_support:
        # Constant block index -> support DMA'd once, stays VMEM-resident.
        sup_spec = pl.BlockSpec((n_k_p, n_out_p), lambda i, k: (0, 0))
    else:
        # Fallback: stream K-slabs (only for very large N / small VMEM).
        sup_spec = pl.BlockSpec((tk, n_out_p), lambda i, k: (k, 0))

    in_specs = [
        pl.BlockSpec((tm, tk), lambda i, k: (i, k)),   # adj tile (bf16)
        sup_spec,
    ]
    args = [adj_p, support]
    if bias is not None:
        b_p = _pad2d(bias.reshape(1, n_out), (1, n_out_p), jnp.float32)
        in_specs.append(pl.BlockSpec((1, n_out_p), lambda i, k: (0, 0)))
        args.append(b_p)

    kernel_fn = _make_spmm_kernel(tk, resident_support, bias is not None)

    out_p = pl.pallas_call(
        kernel_fn,
        out_shape=jax.ShapeDtypeStruct((n_rows_p, n_out_p), jnp.float32),
        grid_spec=pltpu.PrefetchScalarGridSpec(
            num_scalar_prefetch=0,
            grid=grid,
            in_specs=in_specs,
            # Output block index constant along k -> acts as the accumulator.
            out_specs=pl.BlockSpec((tm, n_out_p), lambda i, k: (i, 0)),
        ),
        compiler_params=pltpu.CompilerParams(
            # row axis independent (shards across v7x's 2 TCs); K is reduction.
            dimension_semantics=("parallel", "arbitrary"),
            vmem_limit_bytes=vmem_limit,
        ),
    )(*args)

    return out_p[:n, :n_out]


def init_gcn_params(key, n_in, n_out, use_bias=True):
    """Deterministic init matching GraphConvolution.reset_parameters."""
    stdv = 1.0 / math.sqrt(n_out)
    kw, kb = jax.random.split(key)
    weight = jax.random.uniform(kw, (n_in, n_out), jnp.float32,
                                minval=-stdv, maxval=stdv)
    bias = None
    if use_bias:
        bias = jax.random.uniform(kb, (n_out,), jnp.float32,
                                  minval=-stdv, maxval=stdv)
    return weight, bias


if __name__ == "__main__":
    key = jax.random.PRNGKey(0)
    k_x, k_adj, k_p = jax.random.split(key, 3)

    # Small GCN problem: N=256 nodes, n_in=64, n_out=32.
    N, N_IN, N_OUT = 256, 64, 32

    x = jax.random.normal(k_x, (N, N_IN), jnp.float32)
    # Symmetric, row-normalized dense adjacency (synthetic).
    a = jax.random.uniform(k_adj, (N, N), jnp.float32)
    adj = (a + a.T) * 0.5
    adj = adj / jnp.sum(adj, axis=1, keepdims=True)

    weight, bias = init_gcn_params(k_p, N_IN, N_OUT, use_bias=True)

    # With bias.
    out = graph_convolution(x, adj, weight, bias)
    out = jax.block_until_ready(out)
    ref = adj @ (x @ weight) + bias[None, :]
    assert out.shape == (N, N_OUT)
    # adj/support travel in bf16 (f32 accumulation) -> loose tolerance.
    assert jnp.allclose(out, ref, atol=2e-2, rtol=2e-2), "mismatch vs reference"

    # Without bias (exercises the no-bias kernel variant).
    out_nb = graph_convolution(x, adj, weight, None)
    out_nb = jax.block_until_ready(out_nb)
    ref_nb = adj @ (x @ weight)
    assert jnp.allclose(out_nb, ref_nb, atol=2e-2, rtol=2e-2), "mismatch (no bias)"

    # Exercise the multi-K-tile accumulation path (tk < N) and odd N padding.
    N2 = 300
    x2 = jax.random.normal(k_x, (N2, N_IN), jnp.float32)
    a2 = jax.random.uniform(k_adj, (N2, N2), jnp.float32)
    adj2 = (a2 + a2.T) * 0.5
    adj2 = adj2 / jnp.sum(adj2, axis=1, keepdims=True)
    out2 = graph_convolution(x2, adj2, weight, bias, row_tile=128, k_tile=128)
    out2 = jax.block_until_ready(out2)
    ref2 = adj2 @ (x2 @ weight) + bias[None, :]
    assert jnp.allclose(out2, ref2, atol=2e-2, rtol=2e-2), "mismatch (tiled K)"

    print("KERNEL_OK")
</pallas_src>

<mosaic_0001>
module attributes {stable_mosaic.version = 11 : i64} {
  func.func @_xw_kernel(%arg0: i32, %arg1: memref<256x64xf32, #tpu.memory_space<vmem>>, %arg2: memref<64x128xf32, #tpu.memory_space<vmem>>, %arg3: memref<256x128xbf16, #tpu.memory_space<vmem>>) attributes {dimension_semantics = [#tpu.dimension_semantics<parallel>], iteration_bounds = array<i64: 1>, scalar_prefetch = 0 : i64, scratch_operands = 0 : i64, tpu.core_type = #tpu.core_type<tc>, window_params = [{transform_indices = @transform_0, window_bounds = array<i64: 256, 64>}, {pipeline_mode = #tpu.pipeline_mode<synchronous>, transform_indices = @transform_1, window_bounds = array<i64: 64, 128>}, {transform_indices = @transform_2, window_bounds = array<i64: 256, 128>}]} {
    %c0 = arith.constant 0 : index
    %c0_0 = arith.constant 0 : index
    %0 = vector.load %arg1[%c0, %c0_0] : memref<256x64xf32, #tpu.memory_space<vmem>>, vector<256x64xf32>
    %c0_1 = arith.constant 0 : index
    %c0_2 = arith.constant 0 : index
    %1 = vector.load %arg2[%c0_1, %c0_2] : memref<64x128xf32, #tpu.memory_space<vmem>>, vector<64x128xf32>
    %cst = arith.constant dense<0.000000e+00> : vector<256x128xf32>
    %2 = tpu.matmul %0, %1, %cst {dimension_numbers = #tpu.dot_dimension_numbers<[1], [0], [0], [1], [0, 0, 1, 1], [], []>} : vector<256x64xf32>, vector<64x128xf32>, vector<256x128xf32> -> vector<256x128xf32>
    %3 = arith.truncf %2 : vector<256x128xf32> to vector<256x128xbf16>
    %c0_3 = arith.constant 0 : index
    %c0_4 = arith.constant 0 : index
    %4 = vector.load %arg3[%c0_3, %c0_4] : memref<256x128xbf16, #tpu.memory_space<vmem>>, vector<256x128xbf16>
    tpu.vector_store %arg3[%c0_3, %c0_4], %3 {strides = array<i32>} : memref<256x128xbf16, #tpu.memory_space<vmem>>, vector<256x128xbf16>,
    return
  }
  func.func @transform_0(%arg0: i32) -> (i32, i32) {
    %c0_i32 = arith.constant 0 : i32
    %c0_i32_0 = arith.constant 0 : i32
    return %arg0, %c0_i32 : i32, i32
  }
  func.func @transform_1(%arg0: i32) -> (i32, i32) {
    %c0_i32 = arith.constant 0 : i32
    %c0_i32_0 = arith.constant 0 : i32
    %c0_i32_1 = arith.constant 0 : i32
    return %c0_i32, %c0_i32_0 : i32, i32
  }
  func.func @transform_2(%arg0: i32) -> (i32, i32) {
    %c0_i32 = arith.constant 0 : i32
    %c0_i32_0 = arith.constant 0 : i32
    return %arg0, %c0_i32 : i32, i32
  }
}

</mosaic_0001>

<llo_original>
// kernel: tpu_custom_call.1
$region0: #{tpu_custom_call.1}
  #allocation0 [shape = 'u32[]', space=smem, size = 0x4, offset = 0x4, fixed_abs, tag = 'smem constant byte address 0x4 - core index']
  #allocation1 [shape = 'u32[144,128]{1,0:T(1,128)}', space=vmem, size = 0x12000, scoped, tag = 'internal scratch']
  %s0 = inlined_call_operand.vmem [shape: f32[256,64], index: 0, kind: input, shape index: {}]
  %s1 = inlined_call_operand.vmem [shape: f32[64,128], index: 1, kind: input, shape index: {}]
  %s2 = inlined_call_operand.hbm [shape: bf16[256,128], index: 2, kind: output, shape index: {}]
  %s3 = sld [smem:[#allocation0]]
  $region18: #{tpu_custom_call.1} parent=0
    _
  %s5 = ssub.s32 1, %s3
  %s6 = scalar_select 0, %s5, %s3
  $region1: #{tpu_custom_call.1} parent=0
    #allocation2 [shape = 'u8[65536]{0}', space=vmem, size = 0x10000, scoped, tag = 'output window, operand 0, single buffered']
    #allocation3 [shape = 's32[1]{0}', space=sflag, size = 0x4, scoped, tag = 'scoped memory for tpu_custom_call.1']
    %7 = vsyncpa [#allocation3], 0
    // Predicated region
    $region2: #{tpu_custom_call.1} parent=1 // pred_check
      _
    $region3: #{tpu_custom_call.1} parent=1 // pred_check_branch
      %9 = sbr.rel (0) target = $region5
    $region4: #{tpu_custom_call.1} parent=1 // pred_region
      _
    $region5: #{tpu_custom_call.1} parent=1 // pred_fallthru
      _
    // Predicated region
    $region6: #{tpu_custom_call.1} parent=1 // pred_check
      _
    $region7: #{tpu_custom_call.1} parent=1 // pred_check_branch
      %11 = sbr.rel (0) target = $region9
    $region8: #{tpu_custom_call.1} parent=1 // pred_region
      _
    $region9: #{tpu_custom_call.1} parent=1 // pred_fallthru
      _
    %v12 = vld [vmem:[%s0] sm:$0xff]
    %v13 = vld [vmem:[%s0 + $0x8] sm:$0xff]
    %v14 = vld [vmem:[%s0 + $0x10] sm:$0xff]
    %v15 = vld [vmem:[%s0 + $0x18] sm:$0xff]
    %v16 = vld [vmem:[%s0 + $0x20] sm:$0xff]
    %v17 = vld [vmem:[%s0 + $0x28] sm:$0xff]
    %v18 = vld [vmem:[%s0 + $0x30] sm:$0xff]
    %v19 = vld [vmem:[%s0 + $0x38] sm:$0xff]
    %v20 = vld [vmem:[%s0 + $0x40] sm:$0xff]
    %v21 = vld [vmem:[%s0 + $0x48] sm:$0xff]
    %v22 = vld [vmem:[%s0 + $0x50] sm:$0xff]
    %v23 = vld [vmem:[%s0 + $0x58] sm:$0xff]
    %v24 = vld [vmem:[%s0 + $0x60] sm:$0xff]
    %v25 = vld [vmem:[%s0 + $0x68] sm:$0xff]
    %v26 = vld [vmem:[%s0 + $0x70] sm:$0xff]
    %v27 = vld [vmem:[%s0 + $0x78] sm:$0xff]
    %v28 = vld [vmem:[%s0 + $0x80] sm:$0xff]
    %v29 = vld [vmem:[%s0 + $0x88] sm:$0xff]
    %v30 = vld [vmem:[%s0 + $0x90] sm:$0xff]
    %v31 = vld [vmem:[%s0 + $0x98] sm:$0xff]
    %v32 = vld [vmem:[%s0 + $0xa0] sm:$0xff]
    %v33 = vld [vmem:[%s0 + $0xa8] sm:$0xff]
    %v34 = vld [vmem:[%s0 + $0xb0] sm:$0xff]
    %v35 = vld [vmem:[%s0 + $0xb8] sm:$0xff]
    %v36 = vld [vmem:[%s0 + $0xc0] sm:$0xff]
    %v37 = vld [vmem:[%s0 + $0xc8] sm:$0xff]
    %v38 = vld [vmem:[%s0 + $0xd0] sm:$0xff]
    %v39 = vld [vmem:[%s0 + $0xd8] sm:$0xff]
    %v40 = vld [vmem:[%s0 + $0xe0] sm:$0xff]
    %v41 = vld [vmem:[%s0 + $0xe8] sm:$0xff]
    %v42 = vld [vmem:[%s0 + $0xf0] sm:$0xff]
    %v43 = vld [vmem:[%s0 + $0xf8] sm:$0xff]
    %v44 = vld [vmem:[%s1] sm:$0xff]
    %v45 = vld [vmem:[%s1 + $0x8] sm:$0xff]
    %v46 = vld [vmem:[%s1 + $0x10] sm:$0xff]
    %v47 = vld [vmem:[%s1 + $0x18] sm:$0xff]
    %v48 = vld [vmem:[%s1 + $0x20] sm:$0xff]
    %v49 = vld [vmem:[%s1 + $0x28] sm:$0xff]
    %v50 = vld [vmem:[%s1 + $0x30] sm:$0xff]
    %v51 = vld [vmem:[%s1 + $0x38] sm:$0xff]
    %vm52 = vcmask 523264
    %v54 = vsel %vm52, %v12, 0
    %v57 = vsel %vm52, %v13, 0
    %v60 = vsel %vm52, %v14, 0
    %v63 = vsel %vm52, %v15, 0
    %v66 = vsel %vm52, %v16, 0
    %v69 = vsel %vm52, %v17, 0
    %v72 = vsel %vm52, %v18, 0
    %v75 = vsel %vm52, %v19, 0
    %v78 = vsel %vm52, %v20, 0
    %v81 = vsel %vm52, %v21, 0
    %v84 = vsel %vm52, %v22, 0
    %v87 = vsel %vm52, %v23, 0
    %v90 = vsel %vm52, %v24, 0
    %v93 = vsel %vm52, %v25, 0
    %v96 = vsel %vm52, %v26, 0
    %v99 = vsel %vm52, %v27, 0
    %v102 = vsel %vm52, %v28, 0
    %v105 = vsel %vm52, %v29, 0
    %v108 = vsel %vm52, %v30, 0
    %v111 = vsel %vm52, %v31, 0
    %v114 = vsel %vm52, %v32, 0
    %v117 = vsel %vm52, %v33, 0
    %v120 = vsel %vm52, %v34, 0
    %v123 = vsel %vm52, %v35, 0
    %v126 = vsel %vm52, %v36, 0
    %v129 = vsel %vm52, %v37, 0
    %v132 = vsel %vm52, %v38, 0
    %v135 = vsel %vm52, %v39, 0
    %v138 = vsel %vm52, %v40, 0
    %v141 = vsel %vm52, %v41, 0
    %v144 = vsel %vm52, %v42, 0
    %v147 = vsel %vm52, %v43, 0
    %149 = vmatprep.subr.mxu0 0.0
    %150 = vmatpush1.msra.mxu0 0.0
    %151 = vmatprep.subr.mxu0 0.0
    %152 = vmatpush1.msra.mxu0 0.0
    %153 = vmatprep.subr.mxu0 0.0
    %154 = vmatpush1.msra.mxu0 0.0
    %155 = vmatprep.subr.mxu0 0.0
    %156 = vmatpush1.msra.mxu0 0.0
    %157 = vmatprep.subr.mxu0 0.0
    %158 = vmatpush1.msra.mxu0 0.0
    %159 = vmatprep.subr.mxu0 0.0
    %160 = vmatpush1.msra.mxu0 0.0
    %161 = vmatprep.subr.mxu0 0.0
    %162 = vmatpush1.msra.mxu0 0.0
    %163 = vmatprep.subr.mxu0 0.0
    %164 = vmatpush1.msra.mxu0 0.0
    %165 = vmatprep.subr.mxu0 0.0
    %166 = vmatpush1.msra.mxu0 %v51
    %167 = vmatprep.subr.mxu0 0.0
    %168 = vmatpush1.msra.mxu0 %v50
    %169 = vmatprep.subr.mxu0 0.0
    %170 = vmatpush1.msra.mxu0 %v49
    %171 = vmatprep.subr.mxu0 0.0
    %172 = vmatpush1.msra.mxu0 %v48
    %173 = vmatprep.subr.mxu0 0.0
    %174 = vmatpush1.msra.mxu0 %v47
    %175 = vmatprep.subr.mxu0 0.0
    %176 = vmatpush1.msra.mxu0 %v46
    %177 = vmatprep.subr.mxu0 0.0
    %178 = vmatpush1.msra.mxu0 %v45
    %179 = vmatprep.subr.mxu0 0.0
    %180 = vmatpush1.msra.mxu0 %v44
    %181 = vmatprep.subr.mxu0 0.0
    %182 = vmatpush2.msra.mxu0 0.0
    %183 = vmatprep.subr.mxu0 0.0
    %184 = vmatpush2.msra.mxu0 0.0
    %185 = vmatprep.subr.mxu0 0.0
    %186 = vmatpush2.msra.mxu0 0.0
    %187 = vmatprep.subr.mxu0 0.0
    %188 = vmatpush2.msra.mxu0 0.0
    %189 = vmatprep.subr.mxu0 0.0
    %190 = vmatpush2.msra.mxu0 0.0
    %191 = vmatprep.subr.mxu0 0.0
    %192 = vmatpush2.msra.mxu0 0.0
    %193 = vmatprep.subr.mxu0 0.0
    %194 = vmatpush2.msra.mxu0 0.0
    %195 = vmatprep.subr.mxu0 0.0
    %196 = vmatpush2.msra.mxu0 0.0
    %197 = vmatprep.subr.mxu0 0.0
    %198 = vmatpush2.msra.mxu0 0.0
    %199 = vmatprep.subr.mxu0 0.0
    %200 = vmatpush2.msra.mxu0 0.0
    %201 = vmatprep.subr.mxu0 0.0
    %202 = vmatpush2.msra.mxu0 0.0
    %203 = vmatprep.subr.mxu0 0.0
    %204 = vmatpush2.msra.mxu0 0.0
    %205 = vmatprep.subr.mxu0 0.0
    %206 = vmatpush2.msra.mxu0 0.0
    %207 = vmatprep.subr.mxu0 0.0
    %208 = vmatpush2.msra.mxu0 0.0
    %209 = vmatprep.subr.mxu0 0.0
    %210 = vmatpush2.msra.mxu0 0.0
    %211 = vmatprep.subr.mxu0 0.0
    %212 = vmatpush2.msra.mxu0 0.0
    %213 = vmatprep.mubr.f32.mxu0 0.0
    %214 = vmatmul.mubr.f32.gmra.mxu0 %v54
    %v215 = vpop.f32.mrf.mxu0
    %v216 = vadd.f32 0.0, %v215
    %v217 = vpop.f32.mrf.mxu0
    %218 = vmatprep.mubr.f32.mxu0 0.0
    %219 = vmatmul.mubr.f32.gmra.mxu0 %v57
    %v220 = vpop.f32.mrf.mxu0
    %v221 = vadd.f32 0.0, %v220
    %v222 = vpop.f32.mrf.mxu0
    %223 = vmatprep.mubr.f32.mxu0 0.0
    %224 = vmatmul.mubr.f32.gmra.mxu0 %v60
    %v225 = vpop.f32.mrf.mxu0
    %v226 = vadd.f32 0.0, %v225
    %v227 = vpop.f32.mrf.mxu0
    %228 = vmatprep.mubr.f32.mxu0 0.0
    %229 = vmatmul.mubr.f32.gmra.mxu0 %v63
    %v230 = vpop.f32.mrf.mxu0
    %v231 = vadd.f32 0.0, %v230
    %v232 = vpop.f32.mrf.mxu0
    %233 = vmatprep.mubr.f32.mxu0 0.0
    %234 = vmatmul.mubr.f32.gmra.mxu0 %v66
    %v235 = vpop.f32.mrf.mxu0
    %v236 = vadd.f32 0.0, %v235
    %v237 = vpop.f32.mrf.mxu0
    %238 = vmatprep.mubr.f32.mxu0 0.0
    %239 = vmatmul.mubr.f32.gmra.mxu0 %v69
    %v240 = vpop.f32.mrf.mxu0
    %v241 = vadd.f32 0.0, %v240
    %v242 = vpop.f32.mrf.mxu0
    %243 = vmatprep.mubr.f32.mxu0 0.0
    %244 = vmatmul.mubr.f32.gmra.mxu0 %v72
    %v245 = vpop.f32.mrf.mxu0
    %v246 = vadd.f32 0.0, %v245
    %v247 = vpop.f32.mrf.mxu0
    %248 = vmatprep.mubr.f32.mxu0 0.0
    %249 = vmatmul.mubr.f32.gmra.mxu0 %v75
    %v250 = vpop.f32.mrf.mxu0
    %v251 = vadd.f32 0.0, %v250
    %v252 = vpop.f32.mrf.mxu0
    %253 = vmatprep.mubr.f32.mxu0 0.0
    %254 = vmatmul.mubr.f32.gmra.mxu0 %v78
    %v255 = vpop.f32.mrf.mxu0
    %v256 = vadd.f32 0.0, %v255
    %v257 = vpop.f32.mrf.mxu0
    %258 = vmatprep.mubr.f32.mxu0 0.0
    %259 = vmatmul.mubr.f32.gmra.mxu0 %v81
    %v260 = vpop.f32.mrf.mxu0
    %v261 = vadd.f32 0.0, %v260
    %v262 = vpop.f32.mrf.mxu0
    %263 = vmatprep.mubr.f32.mxu0 0.0
    %264 = vmatmul.mubr.f32.gmra.mxu0 %v84
    %v265 = vpop.f32.mrf.mxu0
    %v266 = vadd.f32 0.0, %v265
    %v267 = vpop.f32.mrf.mxu0
    %268 = vmatprep.mubr.f32.mxu0 0.0
    %269 = vmatmul.mubr.f32.gmra.mxu0 %v87
    %v270 = vpop.f32.mrf.mxu0
    %v271 = vadd.f32 0.0, %v270
    %v272 = vpop.f32.mrf.mxu0
    %273 = vmatprep.mubr.f32.mxu0 0.0
    %274 = vmatmul.mubr.f32.gmra.mxu0 %v90
    %v275 = vpop.f32.mrf.mxu0
    %v276 = vadd.f32 0.0, %v275
    %v277 = vpop.f32.mrf.mxu0
    %278 = vmatprep.mubr.f32.mxu0 0.0
    %279 = vmatmul.mubr.f32.gmra.mxu0 %v93
    %v280 = vpop.f32.mrf.mxu0
    %v281 = vadd.f32 0.0, %v280
    %v282 = vpop.f32.mrf.mxu0
    %283 = vmatprep.mubr.f32.mxu0 0.0
    %284 = vmatmul.mubr.f32.gmra.mxu0 %v96
    %v285 = vpop.f32.mrf.mxu0
    %v286 = vadd.f32 0.0, %v285
    %v287 = vpop.f32.mrf.mxu0
    %288 = vmatprep.mubr.f32.mxu0 0.0
    %289 = vmatmul.mubr.f32.gmra.mxu0 %v99
    %v290 = vpop.f32.mrf.mxu0
    %v291 = vadd.f32 0.0, %v290
    %v292 = vpop.f32.mrf.mxu0
    %293 = vmatprep.mubr.f32.mxu0 0.0
    %294 = vmatmul.mubr.f32.gmra.mxu0 %v102
    %v295 = vpop.f32.mrf.mxu0
    %v296 = vadd.f32 0.0, %v295
    %v297 = vpop.f32.mrf.mxu0
    %298 = vmatprep.mubr.f32.mxu0 0.0
    %299 = vmatmul.mubr.f32.gmra.mxu0 %v105
    %v300 = vpop.f32.mrf.mxu0
    %v301 = vadd.f32 0.0, %v300
    %v302 = vpop.f32.mrf.mxu0
    %303 = vmatprep.mubr.f32.mxu0 0.0
    %304 = vmatmul.mubr.f32.gmra.mxu0 %v108
    %v305 = vpop.f32.mrf.mxu0
    %v306 = vadd.f32 0.0, %v305
    %v307 = vpop.f32.mrf.mxu0
    %308 = vmatprep.mubr.f32.mxu0 0.0
    %309 = vmatmul.mubr.f32.gmra.mxu0 %v111
    %v310 = vpop.f32.mrf.mxu0
    %v311 = vadd.f32 0.0, %v310
    %v312 = vpop.f32.mrf.mxu0
    %313 = vmatprep.mubr.f32.mxu0 0.0
    %314 = vmatmul.mubr.f32.gmra.mxu0 %v114
    %v315 = vpop.f32.mrf.mxu0
    %v316 = vadd.f32 0.0, %v315
    %v317 = vpop.f32.mrf.mxu0
    %318 = vmatprep.mubr.f32.mxu0 0.0
    %319 = vmatmul.mubr.f32.gmra.mxu0 %v117
    %v320 = vpop.f32.mrf.mxu0
    %v321 = vadd.f32 0.0, %v320
    %v322 = vpop.f32.mrf.mxu0
    %323 = vmatprep.mubr.f32.mxu0 0.0
    %324 = vmatmul.mubr.f32.gmra.mxu0 %v120
    %v325 = vpop.f32.mrf.mxu0
    %v326 = vadd.f32 0.0, %v325
    %v327 = vpop.f32.mrf.mxu0
    %328 = vmatprep.mubr.f32.mxu0 0.0
    %329 = vmatmul.mubr.f32.gmra.mxu0 %v123
    %v330 = vpop.f32.mrf.mxu0
    %v331 = vadd.f32 0.0, %v330
    %v332 = vpop.f32.mrf.mxu0
    %333 = vmatprep.mubr.f32.mxu0 0.0
    %334 = vmatmul.mubr.f32.gmra.mxu0 %v126
    %v335 = vpop.f32.mrf.mxu0
    %v336 = vadd.f32 0.0, %v335
    %v337 = vpop.f32.mrf.mxu0
    %338 = vmatprep.mubr.f32.mxu0 0.0
    %339 = vmatmul.mubr.f32.gmra.mxu0 %v129
    %v340 = vpop.f32.mrf.mxu0
    %v341 = vadd.f32 0.0, %v340
    %v342 = vpop.f32.mrf.mxu0
    %343 = vmatprep.mubr.f32.mxu0 0.0
    %344 = vmatmul.mubr.f32.gmra.mxu0 %v132
    %v345 = vpop.f32.mrf.mxu0
    %v346 = vadd.f32 0.0, %v345
    %v347 = vpop.f32.mrf.mxu0
    %348 = vmatprep.mubr.f32.mxu0 0.0
    %349 = vmatmul.mubr.f32.gmra.mxu0 %v135
    %v350 = vpop.f32.mrf.mxu0
    %v351 = vadd.f32 0.0, %v350
    %v352 = vpop.f32.mrf.mxu0
    %353 = vmatprep.mubr.f32.mxu0 0.0
    %354 = vmatmul.mubr.f32.gmra.mxu0 %v138
    %v355 = vpop.f32.mrf.mxu0
    %v356 = vadd.f32 0.0, %v355
    %v357 = vpop.f32.mrf.mxu0
    %358 = vmatprep.mubr.f32.mxu0 0.0
    %359 = vmatmul.mubr.f32.gmra.mxu0 %v141
    %v360 = vpop.f32.mrf.mxu0
    %v361 = vadd.f32 0.0, %v360
    %v362 = vpop.f32.mrf.mxu0
    %363 = vmatprep.mubr.f32.mxu0 0.0
    %364 = vmatmul.mubr.f32.gmra.mxu0 %v144
    %v365 = vpop.f32.mrf.mxu0
    %v366 = vadd.f32 0.0, %v365
    %v367 = vpop.f32.mrf.mxu0
    %368 = vmatprep.mubr.f32.mxu0 0.0
    %369 = vmatmul.mubr.f32.gmra.mxu0 %v147
    %v370 = vpop.f32.mrf.mxu0
    %v371 = vadd.f32 0.0, %v370
    %v372 = vpop.f32.mrf.mxu0
    %373 = vdwg.mxu0
    %v374 = vpack.c.bf16 %v221, %v216
    %v375 = vpack.c.bf16 %v231, %v226
    %v376 = vpack.c.bf16 %v241, %v236
    %v377 = vpack.c.bf16 %v251, %v246
    %v378 = vpack.c.bf16 %v261, %v256
    %v379 = vpack.c.bf16 %v271, %v266
    %v380 = vpack.c.bf16 %v281, %v276
    %v381 = vpack.c.bf16 %v291, %v286
    %v382 = vpack.c.bf16 %v301, %v296
    %v383 = vpack.c.bf16 %v311, %v306
    %v384 = vpack.c.bf16 %v321, %v316
    %v385 = vpack.c.bf16 %v331, %v326
    %v386 = vpack.c.bf16 %v341, %v336
    %v387 = vpack.c.bf16 %v351, %v346
    %v388 = vpack.c.bf16 %v361, %v356
    %v389 = vpack.c.bf16 %v371, %v366
    %v406 = vunpack.c.l.b16 %v374
    %v407 = vunpack.c.h.b16 %v374
    %v408 = vunpack.c.l.b16 %v375
    %v409 = vunpack.c.h.b16 %v375
    %v410 = vunpack.c.l.b16 %v376
    %v411 = vunpack.c.h.b16 %v376
    %v412 = vunpack.c.l.b16 %v377
    %v413 = vunpack.c.h.b16 %v377
    %v414 = vunpack.c.l.b16 %v378
    %v415 = vunpack.c.h.b16 %v378
    %v416 = vunpack.c.l.b16 %v379
    %v417 = vunpack.c.h.b16 %v379
    %v418 = vunpack.c.l.b16 %v380
    %v419 = vunpack.c.h.b16 %v380
    %v420 = vunpack.c.l.b16 %v381
    %v421 = vunpack.c.h.b16 %v381
    %v422 = vunpack.c.l.b16 %v382
    %v423 = vunpack.c.h.b16 %v382
    %v424 = vunpack.c.l.b16 %v383
    %v425 = vunpack.c.h.b16 %v383
    %v426 = vunpack.c.l.b16 %v384
    %v427 = vunpack.c.h.b16 %v384
    %v428 = vunpack.c.l.b16 %v385
    %v429 = vunpack.c.h.b16 %v385
    %v430 = vunpack.c.l.b16 %v386
    %v431 = vunpack.c.h.b16 %v386
    %v432 = vunpack.c.l.b16 %v387
    %v433 = vunpack.c.h.b16 %v387
    %v434 = vunpack.c.l.b16 %v388
    %v435 = vunpack.c.h.b16 %v388
    %v436 = vunpack.c.l.b16 %v389
    %v437 = vunpack.c.h.b16 %v389
    %v438 = vpack.c.b16 %v406, %v406
    %v439 = vpack.c.b16 %v407, %v407
    %v440 = vpack.c.b16 %v408, %v408
    %v441 = vpack.c.b16 %v409, %v409
    %v442 = vpack.c.b16 %v410, %v410
    %v443 = vpack.c.b16 %v411, %v411
    %v444 = vpack.c.b16 %v412, %v412
    %v445 = vpack.c.b16 %v413, %v413
    %v446 = vpack.c.b16 %v414, %v414
    %v447 = vpack.c.b16 %v415, %v415
    %v448 = vpack.c.b16 %v416, %v416
    %v449 = vpack.c.b16 %v417, %v417
    %v450 = vpack.c.b16 %v418, %v418
    %v451 = vpack.c.b16 %v419, %v419
    %v452 = vpack.c.b16 %v420, %v420
    %v453 = vpack.c.b16 %v421, %v421
    %v454 = vpack.c.b16 %v422, %v422
    %v455 = vpack.c.b16 %v423, %v423
    %v456 = vpack.c.b16 %v424, %v424
    %v457 = vpack.c.b16 %v425, %v425
    %v458 = vpack.c.b16 %v426, %v426
    %v459 = vpack.c.b16 %v427, %v427
    %v460 = vpack.c.b16 %v428, %v428
    %v461 = vpack.c.b16 %v429, %v429
    %v462 = vpack.c.b16 %v430, %v430
    %v463 = vpack.c.b16 %v431, %v431
    %v464 = vpack.c.b16 %v432, %v432
    %v465 = vpack.c.b16 %v433, %v433
    %v466 = vpack.c.b16 %v434, %v434
    %v467 = vpack.c.b16 %v435, %v435
    %v468 = vpack.c.b16 %v436, %v436
    %v469 = vpack.c.b16 %v437, %v437
    %502 = vst [vmem:[#allocation2] sm:$0xf] %v438
    %503 = vst [vmem:[#allocation2 + $0x4] sm:$0xf] %v439
    %504 = vst [vmem:[#allocation2 + $0x8] sm:$0xf] %v440
    %505 = vst [vmem:[#allocation2 + $0xc] sm:$0xf] %v441
    %506 = vst [vmem:[#allocation2 + $0x10] sm:$0xf] %v442
    %507 = vst [vmem:[#allocation2 + $0x14] sm:$0xf] %v443
    %508 = vst [vmem:[#allocation2 + $0x18] sm:$0xf] %v444
    %509 = vst [vmem:[#allocation2 + $0x1c] sm:$0xf] %v445
    %510 = vst [vmem:[#allocation2 + $0x20] sm:$0xf] %v446
    %511 = vst [vmem:[#allocation2 + $0x24] sm:$0xf] %v447
    %512 = vst [vmem:[#allocation2 + $0x28] sm:$0xf] %v448
    %513 = vst [vmem:[#allocation2 + $0x2c] sm:$0xf] %v449
    %514 = vst [vmem:[#allocation2 + $0x30] sm:$0xf] %v450
    %515 = vst [vmem:[#allocation2 + $0x34] sm:$0xf] %v451
    %516 = vst [vmem:[#allocation2 + $0x38] sm:$0xf] %v452
    %517 = vst [vmem:[#allocation2 + $0x3c] sm:$0xf] %v453
    %518 = vst [vmem:[#allocation2 + $0x40] sm:$0xf] %v454
    %519 = vst [vmem:[#allocation2 + $0x44] sm:$0xf] %v455
    %520 = vst [vmem:[#allocation2 + $0x48] sm:$0xf] %v456
    %521 = vst [vmem:[#allocation2 + $0x4c] sm:$0xf] %v457
    %522 = vst [vmem:[#allocation2 + $0x50] sm:$0xf] %v458
    %523 = vst [vmem:[#allocation2 + $0x54] sm:$0xf] %v459
    %524 = vst [vmem:[#allocation2 + $0x58] sm:$0xf] %v460
    %525 = vst [vmem:[#allocation2 + $0x5c] sm:$0xf] %v461
    %526 = vst [vmem:[#allocation2 + $0x60] sm:$0xf] %v462
    %527 = vst [vmem:[#allocation2 + $0x64] sm:$0xf] %v463
    %528 = vst [vmem:[#allocation2 + $0x68] sm:$0xf] %v464
    %529 = vst [vmem:[#allocation2 + $0x6c] sm:$0xf] %v465
    %530 = vst [vmem:[#allocation2 + $0x70] sm:$0xf] %v466
    %531 = vst [vmem:[#allocation2 + $0x74] sm:$0xf] %v467
    %532 = vst [vmem:[#allocation2 + $0x78] sm:$0xf] %v468
    %533 = vst [vmem:[#allocation2 + $0x7c] sm:$0xf] %v469
    // Predicated region
    $region10: #{tpu_custom_call.1} parent=1 // pred_check
      _
    $region11: #{tpu_custom_call.1} parent=1 // pred_check_branch
      %535 = sbr.rel (0) target = $region13
    $region12: #{tpu_custom_call.1} parent=1 // pred_region
      %s537 = ssub.s32 2048, 2048
      %538 = vsyncadd [#allocation3], %s537
      %s539 = sshll.u32 [#allocation2], 4
      %s540 = int_to_ptr.vmem [resolvable:$true] %s539
      %545 = dma.vmem_to_hbm [thread:$0]  %s540, 2048, %s2, [#allocation3], 64, 64, 4
    $region13: #{tpu_custom_call.1} parent=1 // pred_fallthru
      _
    // Predicated region
    $region14: #{tpu_custom_call.1} parent=1 // pred_check
      _
    $region15: #{tpu_custom_call.1} parent=1 // pred_check_branch
      %547 = sbr.rel (0) target = $region17
    $region16: #{tpu_custom_call.1} parent=1 // pred_region
      %548 = dma.done [#allocation3], 2048
    $region17: #{tpu_custom_call.1} parent=1 // pred_fallthru
      _
    %549 = vsyncpa [#allocation3], 1

</llo_original>
